<compile_context>
chip_gen: v6e
topology: v6e:2x2x1
jax: 0.10.0
libtpu: 0.0.40
codegen_flags: <defaults>
</compile_context>

<pallas_src>
import numpy as np

import jax
import jax.numpy as jnp
from jax.experimental import pallas as pl
from jax.experimental.pallas import tpu as pltpu

EPS = 1e-5


def up_kernel(x_ref, skip_ref, r3_ref, w_ref, shift_ref, o_ref):
    """Fused upsample+pad+concat+Conv1d(k=3,p=1)+BN(eval)+ELU, whole batch.

    x_ref:     (N*Cx, Lx)            raw (not yet upsampled) x channels
    skip_ref:  (N*Cs, L)             skip channels
    r3_ref:    (Lx, 3*L)             static upsample+pad+tap-shift matrix
    w_ref:     (N*Cout, 3*N*Cin)     BN-folded block-diagonal conv weight
    shift_ref: (N*Cout, 1)           folded conv-bias + BN shift
    o_ref:     (N*Cout, L)
    """
    L = o_ref.shape[1]
    ncs = skip_ref.shape[0]

    # x side: upsample x3 + pad2match + the three conv tap shifts + the conv's
    # zero padding, all baked into the static 0/1 matrix R3 -> one small MXU
    # matmul yields the three x tap bands as lane slices of width L.
    xu3 = jnp.dot(x_ref[...], r3_ref[...],
                  preferred_element_type=jnp.float32)          # (N*Cx, 3L)

    # skip side: left/right taps are lane rolls; zero only the wrapped
    # boundary column of each rolled operand (conv zero padding).
    sk = skip_ref[...].astype(jnp.float32)                     # (N*Cs, L)
    lane = jax.lax.broadcasted_iota(jnp.int32, (ncs, L), 1)
    sk_l = jnp.where(lane >= 1, pltpu.roll(sk, shift=1, axis=1), 0.0)
    sk_r = jnp.where(lane <= L - 2, pltpu.roll(sk, shift=L - 1, axis=1), 0.0)

    # Stack all six tap bands on sublanes and do ONE fused conv matmul with
    # the block-diagonal (batch folded into M) BN-folded weight.
    s_all = jnp.concatenate(
        [xu3[:, 0:L], xu3[:, L:2 * L], xu3[:, 2 * L:3 * L], sk_l, sk, sk_r],
        axis=0)                                                # (3*N*Cin, L)
    acc = jnp.dot(w_ref[...], s_all,
                  preferred_element_type=jnp.float32)          # (N*Cout, L)

    # Folded conv-bias + BatchNorm shift, then ELU (alpha=1).  The min(., 0)
    # keeps exp() finite on lanes the where() discards.
    y = acc + shift_ref[...]
    y = jnp.where(y > 0, y, jnp.exp(jnp.minimum(y, 0.0)) - 1.0)
    o_ref[...] = y.astype(o_ref.dtype)


def _tap_band_matrix(Lx, L):
    """Static 0/1 matrix R3 (Lx, 3L).

    x2d @ R3 gives, as three lane slices of width L, the conv operands
    in[:, l-1], in[:, l], in[:, l+1] where in = pad2match(upsample_x3(x)) and
    out-of-range columns are the conv's zero padding.
    """
    d = L - 3 * Lx
    assert d >= 0, "pad2match crop case (3*Lx > L) not supported"
    left = d // 2                       # matches F.pad([d//2, d - d//2])
    R = np.zeros((Lx, L), np.float32)   # centre tap (k=1)
    for i in range(Lx):
        for j in range(3):
            R[i, left + 3 * i + j] = 1.0
    Rl = np.zeros_like(R)
    Rl[:, 1:] = R[:, :-1]               # left tap (k=0): operand in[:, l-1]
    Rr = np.zeros_like(R)
    Rr[:, :-1] = R[:, 1:]               # right tap (k=2): operand in[:, l+1]
    return np.concatenate([Rl, R, Rr], axis=1)


@jax.jit
def up_forward(x, skip, w, b, gamma, beta, rmean, rvar):
    """Full Up.forward.  x: (N, Cx, Lx), skip: (N, Cs, L) -> (N, Cout, L)."""
    N, Cx, Lx = x.shape
    Ns, Cs, L = skip.shape
    Cout, Cin, K = w.shape
    assert Ns == N and Cin == Cx + Cs and K == 3

    # Fold Conv1d bias + eval-mode BatchNorm1d into the weight / one shift,
    # then build the block-diagonal weight that folds the batch into M.
    scale = gamma / jnp.sqrt(rvar + EPS)                          # (Cout,)
    shift = (b * scale + beta - rmean * scale)[:, None]           # (Cout, 1)
    wf = w * scale[:, None, None]                                 # (Cout,Cin,3)
    eye_n = jnp.eye(N, dtype=wf.dtype)
    blocks = ([jnp.kron(eye_n, wf[:, :Cx, k]) for k in range(3)]     # x taps
              + [jnp.kron(eye_n, wf[:, Cx:, k]) for k in range(3)])  # skip taps
    w_big = jnp.concatenate(blocks, axis=1)                       # (N*Cout, 3*N*Cin)
    shift_big = jnp.tile(shift, (N, 1))                           # (N*Cout, 1)

    r3 = jnp.asarray(_tap_band_matrix(Lx, L), dtype=jnp.float32)  # (Lx, 3L)

    x2 = x.reshape(N * Cx, Lx)        # batch folded onto sublanes (reshape only)
    s2 = skip.reshape(N * Cs, L)

    out2 = pl.pallas_call(
        up_kernel,
        out_shape=jax.ShapeDtypeStruct((N * Cout, L), x.dtype),
        grid=(1,),
        in_specs=[
            pl.BlockSpec((N * Cx, Lx), lambda i: (0, 0)),             # x
            pl.BlockSpec((N * Cs, L), lambda i: (0, 0)),              # skip
            pl.BlockSpec((Lx, 3 * L), lambda i: (0, 0)),              # R3
            pl.BlockSpec((N * Cout, 3 * N * Cin), lambda i: (0, 0)),  # weight
            pl.BlockSpec((N * Cout, 1), lambda i: (0, 0)),            # shift
        ],
        out_specs=pl.BlockSpec((N * Cout, L), lambda i: (0, 0)),
        compiler_params=pltpu.CompilerParams(
            dimension_semantics=("arbitrary",)),
    )(x2, s2, r3, w_big, shift_big)

    return out2.reshape(N, Cout, L)


def ref_forward(x, skip, w, b, gamma, beta, rmean, rvar):
    """Pure-JAX reference (mirrors the PyTorch forward in eval mode)."""
    xu = jnp.repeat(x, 3, axis=2)                       # nn.Upsample(3), nearest
    if xu.shape != skip.shape:
        d = skip.shape[2] - xu.shape[2]
        xu = jnp.pad(xu, ((0, 0), (0, 0), (d // 2, d - d // 2)))
    xc = jnp.concatenate([xu, skip], axis=1)
    y = jax.lax.conv_general_dilated(
        xc, w, window_strides=(1,), padding=((1, 1),),
        dimension_numbers=("NCH", "OIH", "NCH"))
    y = y + b[None, :, None]
    y = (y - rmean[None, :, None]) / jnp.sqrt(rvar[None, :, None] + EPS)
    y = y * gamma[None, :, None] + beta[None, :, None]
    return jnp.where(y > 0, y, jnp.exp(jnp.minimum(y, 0.0)) - 1.0)


if __name__ == "__main__":
    key = jax.random.PRNGKey(0)
    k_x, k_s, k_w, k_b, k_g, k_be, k_rm, k_rv = jax.random.split(key, 8)

    # Shapes consistent with Up(ins=8, outs=4):
    #   x:    (N=2, Cx=4, Lx=42) -> upsample x3 -> 126 -> pad2match -> 128
    #   skip: (N=2, Cs=4, L=128)
    N, Cx, Lx = 2, 4, 42
    Cs, L = 4, 128
    ins, outs = Cx + Cs, 4

    x = jax.random.normal(k_x, (N, Cx, Lx), dtype=jnp.float32)
    skip = jax.random.normal(k_s, (N, Cs, L), dtype=jnp.float32)

    # Deterministic synthetic parameters (Conv1d + BatchNorm1d running stats).
    w = jax.random.normal(k_w, (outs, ins, 3), dtype=jnp.float32) * 0.2
    b = jax.random.normal(k_b, (outs,), dtype=jnp.float32) * 0.1
    gamma = 1.0 + 0.1 * jax.random.normal(k_g, (outs,), dtype=jnp.float32)
    beta = 0.1 * jax.random.normal(k_be, (outs,), dtype=jnp.float32)
    rmean = 0.1 * jax.random.normal(k_rm, (outs,), dtype=jnp.float32)
    rvar = jax.random.uniform(k_rv, (outs,), dtype=jnp.float32,
                              minval=0.5, maxval=1.5)

    out = jax.block_until_ready(
        up_forward(x, skip, w, b, gamma, beta, rmean, rvar))
    ref = ref_forward(x, skip, w, b, gamma, beta, rmean, rvar)

    assert out.shape == (N, outs, L), out.shape
    err = float(jnp.max(jnp.abs(out - ref)))
    assert err < 1e-4, err
    print("KERNEL_OK")
</pallas_src>

<mosaic_0001>
module attributes {stable_mosaic.version = 11 : i64} {
  func.func @up_kernel(%arg0: i32, %arg1: memref<8x42xf32, #tpu.memory_space<vmem>>, %arg2: memref<8x128xf32, #tpu.memory_space<vmem>>, %arg3: memref<42x384xf32, #tpu.memory_space<vmem>>, %arg4: memref<8x48xf32, #tpu.memory_space<vmem>>, %arg5: memref<8x1xf32, #tpu.memory_space<vmem>>, %arg6: memref<8x128xf32, #tpu.memory_space<vmem>>) attributes {dimension_semantics = [#tpu.dimension_semantics<arbitrary>], iteration_bounds = array<i64: 1>, scalar_prefetch = 0 : i64, scratch_operands = 0 : i64, tpu.core_type = #tpu.core_type<tc>, window_params = [{pipeline_mode = #tpu.pipeline_mode<synchronous>, transform_indices = @transform_0, window_bounds = array<i64: 8, 42>}, {pipeline_mode = #tpu.pipeline_mode<synchronous>, transform_indices = @transform_1, window_bounds = array<i64: 8, 128>}, {pipeline_mode = #tpu.pipeline_mode<synchronous>, transform_indices = @transform_2, window_bounds = array<i64: 42, 384>}, {pipeline_mode = #tpu.pipeline_mode<synchronous>, transform_indices = @transform_3, window_bounds = array<i64: 8, 48>}, {pipeline_mode = #tpu.pipeline_mode<synchronous>, transform_indices = @transform_4, window_bounds = array<i64: 8, 1>}, {pipeline_mode = #tpu.pipeline_mode<synchronous>, transform_indices = @transform_5, window_bounds = array<i64: 8, 128>}]} {
    %c0 = arith.constant 0 : index
    %c0_0 = arith.constant 0 : index
    %0 = vector.load %arg1[%c0, %c0_0] : memref<8x42xf32, #tpu.memory_space<vmem>>, vector<8x42xf32>
    %c0_1 = arith.constant 0 : index
    %c0_2 = arith.constant 0 : index
    %1 = vector.load %arg3[%c0_1, %c0_2] : memref<42x384xf32, #tpu.memory_space<vmem>>, vector<42x384xf32>
    %cst = arith.constant dense<0.000000e+00> : vector<8x384xf32>
    %2 = tpu.matmul %0, %1, %cst {dimension_numbers = #tpu.dot_dimension_numbers<[1], [0], [0], [1], [0, 0, 1, 1], [], []>} : vector<8x42xf32>, vector<42x384xf32>, vector<8x384xf32> -> vector<8x384xf32>
    %c0_3 = arith.constant 0 : index
    %c0_4 = arith.constant 0 : index
    %3 = vector.load %arg2[%c0_3, %c0_4] : memref<8x128xf32, #tpu.memory_space<vmem>>, vector<8x128xf32>
    %4 = tpu.iota {dimensions = array<i32: 1>} : vector<8x128xi32>
    %c1_i32 = arith.constant 1 : i32
    %5 = vector.broadcast %c1_i32 : i32 to vector<8x128xi32>
    %6 = arith.cmpi sge, %4, %5 : vector<8x128xi32>
    %c1_i32_5 = arith.constant 1 : i32
    %7 = tpu.dynamic_rotate %3 by %c1_i32_5 dim 1 : vector<8x128xf32>, i32 -> vector<8x128xf32>
    %cst_6 = arith.constant 0.000000e+00 : f32
    %8 = vector.broadcast %cst_6 : f32 to vector<8x128xf32>
    %9 = arith.select %6, %7, %8 : vector<8x128xi1>, vector<8x128xf32>
    %c126_i32 = arith.constant 126 : i32
    %10 = vector.broadcast %c126_i32 : i32 to vector<8x128xi32>
    %11 = arith.cmpi sle, %4, %10 : vector<8x128xi32>
    %c127_i32 = arith.constant 127 : i32
    %12 = tpu.dynamic_rotate %3 by %c127_i32 dim 1 : vector<8x128xf32>, i32 -> vector<8x128xf32>
    %cst_7 = arith.constant 0.000000e+00 : f32
    %13 = vector.broadcast %cst_7 : f32 to vector<8x128xf32>
    %14 = arith.select %11, %12, %13 : vector<8x128xi1>, vector<8x128xf32>
    %15 = vector.extract_strided_slice %2 {offsets = [0, 0], sizes = [8, 128], strides = [1, 1]} : vector<8x384xf32> to vector<8x128xf32>
    %16 = vector.extract_strided_slice %2 {offsets = [0, 128], sizes = [8, 128], strides = [1, 1]} : vector<8x384xf32> to vector<8x128xf32>
    %17 = vector.extract_strided_slice %2 {offsets = [0, 256], sizes = [8, 128], strides = [1, 1]} : vector<8x384xf32> to vector<8x128xf32>
    %18 = tpu.concatenate %15, %16, %17, %9, %3, %14 in 0 : vector<8x128xf32>, vector<8x128xf32>, vector<8x128xf32>, vector<8x128xf32>, vector<8x128xf32>, vector<8x128xf32> -> vector<48x128xf32>
    %c0_8 = arith.constant 0 : index
    %c0_9 = arith.constant 0 : index
    %19 = vector.load %arg4[%c0_8, %c0_9] : memref<8x48xf32, #tpu.memory_space<vmem>>, vector<8x48xf32>
    %cst_10 = arith.constant dense<0.000000e+00> : vector<8x128xf32>
    %20 = tpu.matmul %19, %18, %cst_10 {dimension_numbers = #tpu.dot_dimension_numbers<[1], [0], [0], [1], [0, 0, 1, 1], [], []>} : vector<8x48xf32>, vector<48x128xf32>, vector<8x128xf32> -> vector<8x128xf32>
    %c0_11 = arith.constant 0 : index
    %c0_12 = arith.constant 0 : index
    %21 = vector.load %arg5[%c0_11, %c0_12] : memref<8x1xf32, #tpu.memory_space<vmem>>, vector<8x1xf32>
    %22 = vector.broadcast %21 : vector<8x1xf32> to vector<8x128xf32>
    %23 = arith.addf %20, %22 : vector<8x128xf32>
    %cst_13 = arith.constant 0.000000e+00 : f32
    %24 = vector.broadcast %cst_13 : f32 to vector<8x128xf32>
    %25 = arith.cmpf ogt, %23, %24 : vector<8x128xf32>
    %cst_14 = arith.constant 0.000000e+00 : f32
    %26 = vector.broadcast %cst_14 : f32 to vector<8x128xf32>
    %27 = arith.minimumf %23, %26 : vector<8x128xf32>
    %28 = math.exp %27 : vector<8x128xf32>
    %cst_15 = arith.constant 1.000000e+00 : f32
    %29 = vector.broadcast %cst_15 : f32 to vector<8x128xf32>
    %30 = arith.subf %28, %29 : vector<8x128xf32>
    %31 = arith.select %25, %23, %30 : vector<8x128xi1>, vector<8x128xf32>
    %c0_16 = arith.constant 0 : index
    %c0_17 = arith.constant 0 : index
    %32 = vector.load %arg6[%c0_16, %c0_17] : memref<8x128xf32, #tpu.memory_space<vmem>>, vector<8x128xf32>
    tpu.vector_store %arg6[%c0_16, %c0_17], %31 {strides = array<i32>} : memref<8x128xf32, #tpu.memory_space<vmem>>, vector<8x128xf32>,
    return
  }
  func.func @transform_0(%arg0: i32) -> (i32, i32) {
    %c0_i32 = arith.constant 0 : i32
    %c0_i32_0 = arith.constant 0 : i32
    %c0_i32_1 = arith.constant 0 : i32
    return %c0_i32, %c0_i32_0 : i32, i32
  }
  func.func @transform_1(%arg0: i32) -> (i32, i32) {
    %c0_i32 = arith.constant 0 : i32
    %c0_i32_0 = arith.constant 0 : i32
    %c0_i32_1 = arith.constant 0 : i32
    return %c0_i32, %c0_i32_0 : i32, i32
  }
  func.func @transform_2(%arg0: i32) -> (i32, i32) {
    %c0_i32 = arith.constant 0 : i32
    %c0_i32_0 = arith.constant 0 : i32
    %c0_i32_1 = arith.constant 0 : i32
    return %c0_i32, %c0_i32_0 : i32, i32
  }
  func.func @transform_3(%arg0: i32) -> (i32, i32) {
    %c0_i32 = arith.constant 0 : i32
    %c0_i32_0 = arith.constant 0 : i32
    %c0_i32_1 = arith.constant 0 : i32
    return %c0_i32, %c0_i32_0 : i32, i32
  }
  func.func @transform_4(%arg0: i32) -> (i32, i32) {
    %c0_i32 = arith.constant 0 : i32
    %c0_i32_0 = arith.constant 0 : i32
    %c0_i32_1 = arith.constant 0 : i32
    return %c0_i32, %c0_i32_0 : i32, i32
  }
  func.func @transform_5(%arg0: i32) -> (i32, i32) {
    %c0_i32 = arith.constant 0 : i32
    %c0_i32_0 = arith.constant 0 : i32
    %c0_i32_1 = arith.constant 0 : i32
    return %c0_i32, %c0_i32_0 : i32, i32
  }
}

</mosaic_0001>

<llo_original>
// kernel: up_forward.1
$region0: #{up_forward.1}
  #allocation0 [shape = 'u32[]', space=smem, size = 0x4, offset = 0x4, fixed_abs, tag = 'smem constant byte address 0x4 - core index']
  #allocation1 [shape = 'u32[144,128]{1,0:T(1,128)}', space=vmem, size = 0x12000, scoped, tag = 'internal scratch']
  %s0 = inlined_call_operand.vmem [shape: f32[8,42], index: 0, kind: input, shape index: {}]
  %s1 = inlined_call_operand.vmem [shape: f32[8,128], index: 1, kind: input, shape index: {}]
  %s2 = inlined_call_operand.vmem [shape: f32[42,384], index: 2, kind: input, shape index: {}]
  %s3 = inlined_call_operand.vmem [shape: f32[8,48], index: 3, kind: input, shape index: {}]
  %s4 = inlined_call_operand.vmem [shape: f32[8,1], index: 4, kind: input, shape index: {}]
  %s5 = inlined_call_operand.hbm [shape: f32[8,128], index: 5, kind: output, shape index: {}]
  %s6 = sld [smem:[#allocation0]]
  $region30: #{up_forward.1} parent=0
    _
  %s8 = ssub.s32 1, %s6
  %s9 = scalar_select 0, %s8, %s6
  $region1: #{up_forward.1} parent=0
    #allocation2 [shape = 'u8[4096]{0}', space=vmem, size = 0x1000, scoped, tag = 'output window, operand 0, single buffered']
    #allocation3 [shape = 's32[1]{0}', space=sflag, size = 0x4, scoped, tag = 'scoped memory for up_forward.1']
    %10 = vsyncpa [#allocation3], 0
    // Predicated region
    $region2: #{up_forward.1} parent=1 // pred_check
      _
    $region3: #{up_forward.1} parent=1 // pred_check_branch
      %12 = sbr.rel (0) target = $region5
    $region4: #{up_forward.1} parent=1 // pred_region
      _
    $region5: #{up_forward.1} parent=1 // pred_fallthru
      _
    // Predicated region
    $region6: #{up_forward.1} parent=1 // pred_check
      _
    $region7: #{up_forward.1} parent=1 // pred_check_branch
      %14 = sbr.rel (0) target = $region9
    $region8: #{up_forward.1} parent=1 // pred_region
      _
    $region9: #{up_forward.1} parent=1 // pred_fallthru
      _
    // Predicated region
    $region10: #{up_forward.1} parent=1 // pred_check
      _
    $region11: #{up_forward.1} parent=1 // pred_check_branch
      %16 = sbr.rel (0) target = $region13
    $region12: #{up_forward.1} parent=1 // pred_region
      _
    $region13: #{up_forward.1} parent=1 // pred_fallthru
      _
    // Predicated region
    $region14: #{up_forward.1} parent=1 // pred_check
      _
    $region15: #{up_forward.1} parent=1 // pred_check_branch
      %18 = sbr.rel (0) target = $region17
    $region16: #{up_forward.1} parent=1 // pred_region
      _
    $region17: #{up_forward.1} parent=1 // pred_fallthru
      _
    // Predicated region
    $region18: #{up_forward.1} parent=1 // pred_check
      _
    $region19: #{up_forward.1} parent=1 // pred_check_branch
      %20 = sbr.rel (0) target = $region21
    $region20: #{up_forward.1} parent=1 // pred_region
      _
    $region21: #{up_forward.1} parent=1 // pred_fallthru
      _
    %v21 = vld [vmem:[%s0] sm:$0xff]
    %v22 = vld [vmem:[%s2] sm:$0xff]
    %v23 = vld [vmem:[%s2 + $0x8] sm:$0xff]
    %v24 = vld [vmem:[%s2 + $0x10] sm:$0xff]
    %v25 = vld [vmem:[%s2 + $0x18] sm:$0xff]
    %v26 = vld [vmem:[%s2 + $0x20] sm:$0xff]
    %v27 = vld [vmem:[%s2 + $0x28] sm:$0xff]
    %v28 = vld [vmem:[%s2 + $0x30] sm:$0xff]
    %v29 = vld [vmem:[%s2 + $0x38] sm:$0xff]
    %v30 = vld [vmem:[%s2 + $0x40] sm:$0xff]
    %v31 = vld [vmem:[%s2 + $0x48] sm:$0xff]
    %v32 = vld [vmem:[%s2 + $0x50] sm:$0xff]
    %v33 = vld [vmem:[%s2 + $0x58] sm:$0xff]
    %v34 = vld [vmem:[%s2 + $0x60] sm:$0xff]
    %v35 = vld [vmem:[%s2 + $0x68] sm:$0xff]
    %v36 = vld [vmem:[%s2 + $0x70] sm:$0xff]
    %v37 = vld [vmem:[%s2 + $0x78] sm:$0x3]
    %v38 = vld [vmem:[%s2 + $0x80] sm:$0x3]
    %v39 = vld [vmem:[%s2 + $0x88] sm:$0x3]
    %vm40 = vcmask 343040
    %v42 = vsel %vm40, %v21, 0
    %vm44 = vcmask 1041408
    %v46 = vsel %vm44, %v37, 0
    %v49 = vsel %vm44, %v38, 0
    %v52 = vsel %vm44, %v39, 0
    %54 = vmatprep.subr.mxu0 0.0
    %55 = vmatpush1.msra.mxu0 0.0
    %56 = vmatprep.subr.mxu0 0.0
    %57 = vmatpush1.msra.mxu0 0.0
    %58 = vmatprep.subr.mxu0 0.0
    %59 = vmatpush1.msra.mxu0 0.0
    %60 = vmatprep.subr.mxu0 0.0
    %61 = vmatpush1.msra.mxu0 0.0
    %62 = vmatprep.subr.mxu0 0.0
    %63 = vmatpush1.msra.mxu0 0.0
    %64 = vmatprep.subr.mxu0 0.0
    %65 = vmatpush1.msra.mxu0 0.0
    %66 = vmatprep.subr.mxu0 0.0
    %67 = vmatpush1.msra.mxu0 0.0
    %68 = vmatprep.subr.mxu0 0.0
    %69 = vmatpush1.msra.mxu0 0.0
    %70 = vmatprep.subr.mxu0 0.0
    %71 = vmatpush1.msra.mxu0 0.0
    %72 = vmatprep.subr.mxu0 0.0
    %73 = vmatpush1.msra.mxu0 0.0
    %74 = vmatprep.subr.mxu0 %v49
    %75 = vmatpush1.msra.mxu0 %v46
    %76 = vmatprep.subr.mxu0 %v35
    %77 = vmatpush1.msra.mxu0 %v34
    %78 = vmatprep.subr.mxu0 %v32
    %79 = vmatpush1.msra.mxu0 %v31
    %80 = vmatprep.subr.mxu0 %v29
    %81 = vmatpush1.msra.mxu0 %v28
    %82 = vmatprep.subr.mxu0 %v26
    %83 = vmatpush1.msra.mxu0 %v25
    %84 = vmatprep.subr.mxu0 %v23
    %85 = vmatpush1.msra.mxu0 %v22
    %86 = vmatprep.subr.mxu0 0.0
    %87 = vmatpush2.msra.mxu0 0.0
    %88 = vmatprep.subr.mxu0 0.0
    %89 = vmatpush2.msra.mxu0 0.0
    %90 = vmatprep.subr.mxu0 0.0
    %91 = vmatpush2.msra.mxu0 0.0
    %92 = vmatprep.subr.mxu0 0.0
    %93 = vmatpush2.msra.mxu0 0.0
    %94 = vmatprep.subr.mxu0 0.0
    %95 = vmatpush2.msra.mxu0 0.0
    %96 = vmatprep.subr.mxu0 0.0
    %97 = vmatpush2.msra.mxu0 0.0
    %98 = vmatprep.subr.mxu0 0.0
    %99 = vmatpush2.msra.mxu0 0.0
    %100 = vmatprep.subr.mxu0 0.0
    %101 = vmatpush2.msra.mxu0 0.0
    %102 = vmatprep.subr.mxu0 0.0
    %103 = vmatpush2.msra.mxu0 0.0
    %104 = vmatprep.subr.mxu0 0.0
    %105 = vmatpush2.msra.mxu0 0.0
    %106 = vmatprep.subr.mxu0 0.0
    %107 = vmatpush2.msra.mxu0 0.0
    %108 = vmatprep.subr.mxu0 0.0
    %109 = vmatpush2.msra.mxu0 0.0
    %110 = vmatprep.subr.mxu0 0.0
    %111 = vmatpush2.msra.mxu0 0.0
    %112 = vmatprep.subr.mxu0 0.0
    %113 = vmatpush2.msra.mxu0 0.0
    %114 = vmatprep.subr.mxu0 0.0
    %115 = vmatpush2.msra.mxu0 0.0
    %116 = vmatprep.subr.mxu0 0.0
    %117 = vmatpush2.msra.mxu0 0.0
    %118 = vmatprep.mubr.f32.mxu0 0.0
    %119 = vmatmul.mubr.f32.gmra.mxu0 %v42
    %v120 = vpop.f32.mrf.mxu0
    %v121 = vadd.f32 0.0, %v120
    %v122 = vpop.f32.mrf.mxu0
    %v123 = vadd.f32 0.0, %v122
    %124 = vdwg.mxu0
    %125 = vmatprep.subr.mxu0 0.0
    %126 = vmatpush1.msra.mxu0 0.0
    %127 = vmatprep.subr.mxu0 0.0
    %128 = vmatpush1.msra.mxu0 0.0
    %129 = vmatprep.subr.mxu0 0.0
    %130 = vmatpush1.msra.mxu0 0.0
    %131 = vmatprep.subr.mxu0 0.0
    %132 = vmatpush1.msra.mxu0 0.0
    %133 = vmatprep.subr.mxu0 0.0
    %134 = vmatpush1.msra.mxu0 0.0
    %135 = vmatprep.subr.mxu0 0.0
    %136 = vmatpush1.msra.mxu0 0.0
    %137 = vmatprep.subr.mxu0 0.0
    %138 = vmatpush1.msra.mxu0 0.0
    %139 = vmatprep.subr.mxu0 0.0
    %140 = vmatpush1.msra.mxu0 0.0
    %141 = vmatprep.subr.mxu0 0.0
    %142 = vmatpush1.msra.mxu0 0.0
    %143 = vmatprep.subr.mxu0 0.0
    %144 = vmatpush1.msra.mxu0 0.0
    %145 = vmatprep.subr.mxu0 0.0
    %146 = vmatpush1.msra.mxu0 %v52
    %147 = vmatprep.subr.mxu0 0.0
    %148 = vmatpush1.msra.mxu0 %v36
    %149 = vmatprep.subr.mxu0 0.0
    %150 = vmatpush1.msra.mxu0 %v33
    %151 = vmatprep.subr.mxu0 0.0
    %152 = vmatpush1.msra.mxu0 %v30
    %153 = vmatprep.subr.mxu0 0.0
    %154 = vmatpush1.msra.mxu0 %v27
    %155 = vmatprep.subr.mxu0 0.0
    %156 = vmatpush1.msra.mxu0 %v24
    %157 = vmatprep.subr.mxu0 0.0
    %158 = vmatpush2.msra.mxu0 0.0
    %159 = vmatprep.subr.mxu0 0.0
    %160 = vmatpush2.msra.mxu0 0.0
    %161 = vmatprep.subr.mxu0 0.0
    %162 = vmatpush2.msra.mxu0 0.0
    %163 = vmatprep.subr.mxu0 0.0
    %164 = vmatpush2.msra.mxu0 0.0
    %165 = vmatprep.subr.mxu0 0.0
    %166 = vmatpush2.msra.mxu0 0.0
    %167 = vmatprep.subr.mxu0 0.0
    %168 = vmatpush2.msra.mxu0 0.0
    %169 = vmatprep.subr.mxu0 0.0
    %170 = vmatpush2.msra.mxu0 0.0
    %171 = vmatprep.subr.mxu0 0.0
    %172 = vmatpush2.msra.mxu0 0.0
    %173 = vmatprep.subr.mxu0 0.0
    %174 = vmatpush2.msra.mxu0 0.0
    %175 = vmatprep.subr.mxu0 0.0
    %176 = vmatpush2.msra.mxu0 0.0
    %177 = vmatprep.subr.mxu0 0.0
    %178 = vmatpush2.msra.mxu0 0.0
    %179 = vmatprep.subr.mxu0 0.0
    %180 = vmatpush2.msra.mxu0 0.0
    %181 = vmatprep.subr.mxu0 0.0
    %182 = vmatpush2.msra.mxu0 0.0
    %183 = vmatprep.subr.mxu0 0.0
    %184 = vmatpush2.msra.mxu0 0.0
    %185 = vmatprep.subr.mxu0 0.0
    %186 = vmatpush2.msra.mxu0 0.0
    %187 = vmatprep.subr.mxu0 0.0
    %188 = vmatpush2.msra.mxu0 0.0
    %189 = vmatprep.mubr.f32.mxu0 0.0
    %190 = vmatmul.mubr.f32.gmra.mxu0 %v42
    %v191 = vpop.f32.mrf.mxu0
    %v192 = vadd.f32 0.0, %v191
    %v193 = vpop.f32.mrf.mxu0
    %194 = vdwg.mxu0
    %v195 = vld [vmem:[%s1] sm:$0xff]
    %v196 = vlaneseq
    %v197 = vand.u32 %v196, 127
    %vm198 = vcmp.ge.s32.totalorder %v197, 1
    %199 = vrot.lane.b32.xlu0 %v195, 1
    %v200 = vpop.permute.xlu0 %199
    %v201 = vsel %vm198, %v200, 0.0
    %vm202 = vcmp.le.s32.totalorder %v197, 126
    %203 = vrot.lane.b32.xlu0 %v195, 127
    %v204 = vpop.permute.xlu0 %203
    %v205 = vsel %vm202, %v204, 0.0
    %v206 = vld [vmem:[%s3] sm:$0xff]
    %v207 = vld [vmem:[%s4] sm:$0xff]
    %209 = vset.pattern.permute.xlu0 0
    %210 = vperm.xlu0 %209, %v207
    %v211 = vpop.permute.xlu0 %210
    %vm213 = vcmask 392192
    %v215 = vsel %vm213, %v206, 0
    %217 = vmatprep.subr.mxu0 0.0
    %218 = vmatpush1.msra.mxu0 0.0
    %219 = vmatprep.subr.mxu0 0.0
    %220 = vmatpush1.msra.mxu0 0.0
    %221 = vmatprep.subr.mxu0 0.0
    %222 = vmatpush1.msra.mxu0 0.0
    %223 = vmatprep.subr.mxu0 0.0
    %224 = vmatpush1.msra.mxu0 0.0
    %225 = vmatprep.subr.mxu0 0.0
    %226 = vmatpush1.msra.mxu0 0.0
    %227 = vmatprep.subr.mxu0 0.0
    %228 = vmatpush1.msra.mxu0 0.0
    %229 = vmatprep.subr.mxu0 0.0
    %230 = vmatpush1.msra.mxu0 0.0
    %231 = vmatprep.subr.mxu0 0.0
    %232 = vmatpush1.msra.mxu0 0.0
    %233 = vmatprep.subr.mxu0 0.0
    %234 = vmatpush1.msra.mxu0 0.0
    %235 = vmatprep.subr.mxu0 0.0
    %236 = vmatpush1.msra.mxu0 0.0
    %237 = vmatprep.subr.mxu0 0.0
    %238 = vmatpush1.msra.mxu0 %v205
    %239 = vmatprep.subr.mxu0 0.0
    %240 = vmatpush1.msra.mxu0 %v195
    %241 = vmatprep.subr.mxu0 0.0
    %242 = vmatpush1.msra.mxu0 %v201
    %243 = vmatprep.subr.mxu0 0.0
    %244 = vmatpush1.msra.mxu0 %v192
    %245 = vmatprep.subr.mxu0 0.0
    %246 = vmatpush1.msra.mxu0 %v123
    %247 = vmatprep.subr.mxu0 0.0
    %248 = vmatpush1.msra.mxu0 %v121
    %249 = vmatprep.subr.mxu0 0.0
    %250 = vmatpush2.msra.mxu0 0.0
    %251 = vmatprep.subr.mxu0 0.0
    %252 = vmatpush2.msra.mxu0 0.0
    %253 = vmatprep.subr.mxu0 0.0
    %254 = vmatpush2.msra.mxu0 0.0
    %255 = vmatprep.subr.mxu0 0.0
    %256 = vmatpush2.msra.mxu0 0.0
    %257 = vmatprep.subr.mxu0 0.0
    %258 = vmatpush2.msra.mxu0 0.0
    %259 = vmatprep.subr.mxu0 0.0
    %260 = vmatpush2.msra.mxu0 0.0
    %261 = vmatprep.subr.mxu0 0.0
    %262 = vmatpush2.msra.mxu0 0.0
    %263 = vmatprep.subr.mxu0 0.0
    %264 = vmatpush2.msra.mxu0 0.0
    %265 = vmatprep.subr.mxu0 0.0
    %266 = vmatpush2.msra.mxu0 0.0
    %267 = vmatprep.subr.mxu0 0.0
    %268 = vmatpush2.msra.mxu0 0.0
    %269 = vmatprep.subr.mxu0 0.0
    %270 = vmatpush2.msra.mxu0 0.0
    %271 = vmatprep.subr.mxu0 0.0
    %272 = vmatpush2.msra.mxu0 0.0
    %273 = vmatprep.subr.mxu0 0.0
    %274 = vmatpush2.msra.mxu0 0.0
    %275 = vmatprep.subr.mxu0 0.0
    %276 = vmatpush2.msra.mxu0 0.0
    %277 = vmatprep.subr.mxu0 0.0
    %278 = vmatpush2.msra.mxu0 0.0
    %279 = vmatprep.subr.mxu0 0.0
    %280 = vmatpush2.msra.mxu0 0.0
    %281 = vmatprep.mubr.f32.mxu0 0.0
    %282 = vmatmul.mubr.f32.gmra.mxu0 %v215
    %v283 = vpop.f32.mrf.mxu0
    %v284 = vadd.f32 %v211, %v283
    %v285 = vpop.f32.mrf.mxu0
    %286 = vdwg.mxu0
    %vm287 = vcmp.gt.f32.partialorder %v284, 0.0
    %v288 = vmin.f32 %v284, 0.0
    %v289 = vmul.f32 %v288, 1.442695
    %v290 = vpow.pop %v289
    %v291 = vsub.f32 %v290, 1.0
    %v292 = vsel %vm287, %v284, %v291
    %293 = vst [vmem:[#allocation2] sm:$0xff] %v292
    // Predicated region
    $region22: #{up_forward.1} parent=1 // pred_check
      _
    $region23: #{up_forward.1} parent=1 // pred_check_branch
      %295 = sbr.rel (0) target = $region25
    $region24: #{up_forward.1} parent=1 // pred_region
      %s297 = ssub.s32 128, 128
      %298 = vsyncadd [#allocation3], %s297
      %s300 = sshll.u32 [#allocation2], 4
      %s301 = int_to_ptr.vmem [resolvable:$true] %s300
      %303 = dma.vmem_to_hbm [thread:$0]  %s301, 128, %s5, [#allocation3]
    $region25: #{up_forward.1} parent=1 // pred_fallthru
      _
    // Predicated region
    $region26: #{up_forward.1} parent=1 // pred_check
      _
    $region27: #{up_forward.1} parent=1 // pred_check_branch
      %305 = sbr.rel (0) target = $region29
    $region28: #{up_forward.1} parent=1 // pred_region
      %306 = dma.done [#allocation3], 128
    $region29: #{up_forward.1} parent=1 // pred_fallthru
      _
    %307 = vsyncpa [#allocation3], 1

</llo_original>
